<compile_context>
chip_gen: v7x
topology: tpu7x:2x2x1
jax: 0.10.0
libtpu: 0.0.40
codegen_flags: <defaults>
</compile_context>

<pallas_src>
import math

import jax
import jax.numpy as jnp
from jax.experimental import pallas as pl
from jax.experimental.pallas import tpu as pltpu


# -----------------------------------------------------------------------------
# Kernels (VPU elementwise on the current VMEM tile).
# -----------------------------------------------------------------------------
def _div_kernel(a_ref, b_ref, o_ref):
    # Dtype widening in-kernel; also handles (1, bc) vs (br, bc) broadcast
    # tiles via jnp broadcasting.
    o_ref[...] = a_ref[...].astype(o_ref.dtype) / b_ref[...].astype(o_ref.dtype)


def _div_tensor_by_scalar_kernel(a_ref, b_ref, o_ref):
    # b_ref: (1,) float32 scalar in SMEM; splat-broadcast on the VPU.
    o_ref[...] = (a_ref[...] / b_ref[0]).astype(o_ref.dtype)


def _div_scalar_by_tensor_kernel(a_ref, b_ref, o_ref):
    # a_ref: (1,) float32 scalar in SMEM.
    o_ref[...] = (a_ref[0] / b_ref[...]).astype(o_ref.dtype)


# -----------------------------------------------------------------------------
# Wrapper helpers.
# -----------------------------------------------------------------------------
_SMALL_N = 1024            # below this, launch + pipeline prologue dominates
_BUDGET_BYTES = 12 << 20   # one buffer set over all operands; x2 pipelining = 24 MiB
_MIN_BLOCK_BYTES = 256 << 10


def _sublane_multiple(*dtypes):
    """Packed sublane multiple: 8 for 4-byte, 16 for 2-byte, 32 for 1-byte."""
    m = 8
    for dt in dtypes:
        isz = jnp.dtype(dt).itemsize
        if isz == 2:
            m = max(m, 16)
        elif isz == 1:
            m = max(m, 32)
    return m


def _pick_cols(n):
    """Largest lane-dense column count (<=2048) dividing n (n % 128 == 0)."""
    for c in (2048, 1024, 512, 256, 128):
        if n % c == 0:
            return c
    return None


def _want_small_grid_split():
    # v7x shards a "parallel" grid axis across its 2 TensorCores; make sure
    # each core gets >= 2 steps so its DMA pipeline can overlap. v5e/v6e keep
    # the single big block (single TC, per-step overhead only).
    try:
        kind = jax.devices()[0].device_kind.lower()
    except Exception:
        return False
    return "v7" in kind


def _row_block(rows, cols, bytes_per_elem, sublane):
    """Byte-budgeted row block, rounded to the dtype-packed sublane multiple."""
    row_bytes = max(1, cols * bytes_per_elem)
    budget_rows = max(1, _BUDGET_BYTES // row_bytes)
    if budget_rows >= rows:
        block_rows = rows                       # full extent: always legal
    else:
        block_rows = max(sublane, (budget_rows // sublane) * sublane)

    if _want_small_grid_split():
        steps = pl.cdiv(rows, block_rows)
        if steps < 4:
            cand = ((rows // 4) // sublane) * sublane
            if cand >= sublane and cand * row_bytes >= _MIN_BLOCK_BYTES:
                block_rows = cand
    return block_rows


def _compiler_params(n_grid_axes):
    return pltpu.CompilerParams(
        dimension_semantics=("parallel",) * n_grid_axes,
        vmem_limit_bytes=32 * 1024 * 1024,
    )


# -----------------------------------------------------------------------------
# Kernel paths.
# -----------------------------------------------------------------------------
def _div_same_shape(a, b, out_shape, out_dtype, n_total):
    cols = _pick_cols(n_total)
    rows = n_total // cols
    a2 = a.reshape(rows, cols)       # contiguous -> free
    b2 = b.reshape(rows, cols)
    sublane = _sublane_multiple(a.dtype, b.dtype, out_dtype)
    bytes_per_elem = (jnp.dtype(a.dtype).itemsize + jnp.dtype(b.dtype).itemsize
                      + jnp.dtype(out_dtype).itemsize)
    block_rows = _row_block(rows, cols, bytes_per_elem, sublane)
    tile = pl.BlockSpec((block_rows, cols), lambda i: (i, 0))
    out2 = pl.pallas_call(
        _div_kernel,
        out_shape=jax.ShapeDtypeStruct((rows, cols), out_dtype),
        grid=(pl.cdiv(rows, block_rows),),
        in_specs=[tile, tile],
        out_specs=tile,
        compiler_params=_compiler_params(1),
    )(a2, b2)
    return out2.reshape(out_shape)


def _div_with_scalar(a, b, a_is_scalar, out_shape, out_dtype, n_total):
    big = b if a_is_scalar else a
    small = a if a_is_scalar else b
    cols = _pick_cols(n_total)
    rows = n_total // cols
    big2 = big.reshape(rows, cols)
    small_sm = small.reshape(1).astype(jnp.float32)     # 32-bit SMEM scalar
    sublane = _sublane_multiple(big.dtype, out_dtype)
    bytes_per_elem = jnp.dtype(big.dtype).itemsize + jnp.dtype(out_dtype).itemsize
    block_rows = _row_block(rows, cols, bytes_per_elem, sublane)
    tile = pl.BlockSpec((block_rows, cols), lambda i: (i, 0))
    scalar_spec = pl.BlockSpec(memory_space=pltpu.MemorySpace.SMEM)
    if a_is_scalar:
        kernel = _div_scalar_by_tensor_kernel
        in_specs = [scalar_spec, tile]
        operands = (small_sm, big2)
    else:
        kernel = _div_tensor_by_scalar_kernel
        in_specs = [tile, scalar_spec]
        operands = (big2, small_sm)
    out2 = pl.pallas_call(
        kernel,
        out_shape=jax.ShapeDtypeStruct((rows, cols), out_dtype),
        grid=(pl.cdiv(rows, block_rows),),
        in_specs=in_specs,
        out_specs=tile,
        compiler_params=_compiler_params(1),
    )(*operands)
    return out2.reshape(out_shape)


def _div_leading_broadcast(a, b, out_shape, out_dtype):
    """Broadcast over leading axes only (e.g. (N,D)/(1,D)) expressed via the
    small operand's index_map; returns None when not applicable."""
    out_shape = tuple(out_shape)
    nd = len(out_shape)

    def pad(s):
        return (1,) * (nd - len(s)) + tuple(s)

    ap, bp = pad(a.shape), pad(b.shape)
    if ap == out_shape and bp != out_shape:
        big, small, big_is_a, small_p = a, b, True, bp
    elif bp == out_shape and ap != out_shape:
        big, small, big_is_a, small_p = b, a, False, ap
    else:
        return None

    m = None
    for i in range(nd + 1):
        if all(d == 1 for d in small_p[:i]) and small_p[i:] == out_shape[i:]:
            m = i
            break
    if m is None:
        return None

    C = math.prod(out_shape[m:])
    R = math.prod(out_shape[:m])
    if C == 0 or R == 0 or C % 128 != 0:
        return None

    big2 = big.reshape(R, C)
    small2 = small.reshape(1, C)
    sublane = _sublane_multiple(big.dtype, out_dtype)
    bytes_per_elem = jnp.dtype(big.dtype).itemsize + jnp.dtype(out_dtype).itemsize

    if C * bytes_per_elem <= (4 << 20):
        bc = C                      # full-extent columns (always legal)
    else:
        bc = _pick_cols(C)
    n_col_blocks = pl.cdiv(C, bc)
    block_rows = _row_block(R, bc, bytes_per_elem, sublane)

    big_spec = pl.BlockSpec((block_rows, bc), lambda i, j: (i, j))
    small_spec = pl.BlockSpec((1, bc), lambda i, j: (0, j))
    out_spec = pl.BlockSpec((block_rows, bc), lambda i, j: (i, j))
    in_specs = [big_spec, small_spec] if big_is_a else [small_spec, big_spec]
    operands = (big2, small2) if big_is_a else (small2, big2)

    out2 = pl.pallas_call(
        _div_kernel,
        out_shape=jax.ShapeDtypeStruct((R, C), out_dtype),
        grid=(pl.cdiv(R, block_rows), n_col_blocks),
        in_specs=in_specs,
        out_specs=out_spec,
        compiler_params=_compiler_params(2),
    )(*operands)
    return out2.reshape(out_shape)


# -----------------------------------------------------------------------------
# Public entry point: elementwise a / b with torch true-division semantics.
# -----------------------------------------------------------------------------
def pallas_div(a: jax.Array, b: jax.Array) -> jax.Array:
    a = jnp.asarray(a)
    b = jnp.asarray(b)

    out_dtype = jnp.result_type(a, b)
    if jnp.issubdtype(out_dtype, jnp.complexfloating):
        # TODO(synk): complex arithmetic does not lower in Pallas TPU.
        return jnp.divide(a, b)
    if not jnp.issubdtype(out_dtype, jnp.floating):
        out_dtype = jnp.float32       # torch `/` true-divides ints/bools
    if out_dtype == jnp.float64:
        return jnp.divide(a, b)       # x64-only; not a TPU-native dtype

    out_shape = tuple(jnp.broadcast_shapes(a.shape, b.shape))
    n_total = math.prod(out_shape)

    # bool refs are awkward in-kernel; promote once (rare case).
    if a.dtype == jnp.bool_:
        a = a.astype(out_dtype)
    if b.dtype == jnp.bool_:
        b = b.astype(out_dtype)

    # Tiny / empty / 0-d: one fused XLA op beats launch + pipeline prologue.
    if n_total < _SMALL_N:
        return jnp.divide(a, b).astype(out_dtype).reshape(out_shape)

    a_is_scalar = a.size == 1
    b_is_scalar = b.size == 1

    if a_is_scalar != b_is_scalar:
        if n_total % 128 == 0:
            return _div_with_scalar(a, b, a_is_scalar, out_shape, out_dtype, n_total)
    elif a.shape == b.shape:
        if n_total % 128 == 0:
            return _div_same_shape(a, b, out_shape, out_dtype, n_total)
    else:
        res = _div_leading_broadcast(a, b, out_shape, out_dtype)
        if res is not None:
            return res

    # Fallback (non-128-divisible totals, irregular broadcasts): a single
    # fused XLA divide is already at the HBM roofline and avoids any
    # pad/concatenate/broadcast_to materialization passes.
    return jnp.divide(a, b).astype(out_dtype).reshape(out_shape)


if __name__ == "__main__":
    key = jax.random.PRNGKey(0)
    k1, k2, k3, k4, k5 = jax.random.split(key, 5)

    # Primary same-shape case implied by the module's elementwise forward.
    a = jax.random.normal(k1, (2, 4, 16, 16), dtype=jnp.float32)
    b = jax.random.uniform(k2, (2, 4, 16, 16), dtype=jnp.float32,
                           minval=0.5, maxval=2.0)
    out = jax.block_until_ready(pallas_div(a, b))
    ref = a / b
    assert out.shape == ref.shape and out.dtype == ref.dtype
    assert jnp.allclose(out, ref, rtol=1e-6, atol=1e-6)

    # Scalar divisor: stays a 32-bit SMEM scalar, splat in-kernel.
    s = jnp.float32(2.5)
    out_s = jax.block_until_ready(pallas_div(a, s))
    assert jnp.allclose(out_s, a / s, rtol=1e-6, atol=1e-6)

    # Scalar numerator.
    out_sn = jax.block_until_ready(pallas_div(jnp.float32(3.0), b))
    assert jnp.allclose(out_sn, 3.0 / b, rtol=1e-6, atol=1e-6)

    # Leading-axis broadcast handled via index_map (no broadcast_to pass).
    b_row = jax.random.uniform(k3, (16, 16), dtype=jnp.float32,
                               minval=0.5, maxval=2.0)
    out_b = jax.block_until_ready(pallas_div(a, b_row))
    assert jnp.allclose(out_b, a / b_row, rtol=1e-6, atol=1e-6)

    # Integer inputs: true division, widened to f32 inside the kernel.
    ai = jax.random.randint(k4, (2, 4, 16, 16), -100, 100, dtype=jnp.int32)
    bi = jax.random.randint(k5, (2, 4, 16, 16), 1, 50, dtype=jnp.int32)
    out_i = jax.block_until_ready(pallas_div(ai, bi))
    assert out_i.dtype == jnp.float32
    assert jnp.allclose(out_i, ai.astype(jnp.float32) / bi.astype(jnp.float32),
                        rtol=1e-6, atol=1e-6)

    # Non-128-divisible total: fused-XLA fallback (no pad/concat traffic).
    a7 = jax.random.normal(k3, (3, 5, 7), dtype=jnp.float32)
    b7 = jax.random.uniform(k4, (3, 5, 7), dtype=jnp.float32,
                            minval=0.5, maxval=2.0)
    out7 = jax.block_until_ready(pallas_div(a7, b7))
    assert out7.shape == (3, 5, 7)
    assert jnp.allclose(out7, a7 / b7, rtol=1e-6, atol=1e-6)

    print("KERNEL_OK")
</pallas_src>

<mosaic_0001>
module attributes {stable_mosaic.version = 11 : i64} {
  func.func @_div_kernel(%arg0: i32, %arg1: memref<1x2048xf32, #tpu.memory_space<vmem>>, %arg2: memref<1x2048xf32, #tpu.memory_space<vmem>>, %arg3: memref<1x2048xf32, #tpu.memory_space<vmem>>) attributes {dimension_semantics = [#tpu.dimension_semantics<parallel>], iteration_bounds = array<i64: 1>, scalar_prefetch = 0 : i64, scratch_operands = 0 : i64, tpu.core_type = #tpu.core_type<tc>, window_params = [{transform_indices = @transform_0, window_bounds = array<i64: 1, 2048>}, {transform_indices = @transform_1, window_bounds = array<i64: 1, 2048>}, {transform_indices = @transform_2, window_bounds = array<i64: 1, 2048>}]} {
    %c0 = arith.constant 0 : index
    %c0_0 = arith.constant 0 : index
    %0 = vector.load %arg1[%c0, %c0_0] : memref<1x2048xf32, #tpu.memory_space<vmem>>, vector<1x2048xf32>
    %c0_1 = arith.constant 0 : index
    %c0_2 = arith.constant 0 : index
    %1 = vector.load %arg2[%c0_1, %c0_2] : memref<1x2048xf32, #tpu.memory_space<vmem>>, vector<1x2048xf32>
    %2 = arith.divf %0, %1 : vector<1x2048xf32>
    %c0_3 = arith.constant 0 : index
    %c0_4 = arith.constant 0 : index
    %3 = vector.load %arg3[%c0_3, %c0_4] : memref<1x2048xf32, #tpu.memory_space<vmem>>, vector<1x2048xf32>
    tpu.vector_store %arg3[%c0_3, %c0_4], %2 {strides = array<i32>} : memref<1x2048xf32, #tpu.memory_space<vmem>>, vector<1x2048xf32>,
    return
  }
  func.func @transform_0(%arg0: i32) -> (i32, i32) {
    %c0_i32 = arith.constant 0 : i32
    %c0_i32_0 = arith.constant 0 : i32
    return %arg0, %c0_i32 : i32, i32
  }
  func.func @transform_1(%arg0: i32) -> (i32, i32) {
    %c0_i32 = arith.constant 0 : i32
    %c0_i32_0 = arith.constant 0 : i32
    return %arg0, %c0_i32 : i32, i32
  }
  func.func @transform_2(%arg0: i32) -> (i32, i32) {
    %c0_i32 = arith.constant 0 : i32
    %c0_i32_0 = arith.constant 0 : i32
    return %arg0, %c0_i32 : i32, i32
  }
}

</mosaic_0001>

<llo_original>
// kernel: tpu_custom_call.1
$region0: #{tpu_custom_call.1}
  #allocation0 [shape = 'u32[]', space=smem, size = 0x4, offset = 0x4, fixed_abs, tag = 'smem constant byte address 0x4 - core index']
  #allocation1 [shape = 'u32[144,128]{1,0:T(1,128)}', space=vmem, size = 0x12000, scoped, tag = 'internal scratch']
  %s0 = inlined_call_operand.hbm [shape: f32[1,2048], index: 0, kind: input, shape index: {}]
  %s1 = inlined_call_operand.hbm [shape: f32[1,2048], index: 1, kind: input, shape index: {}]
  %s2 = inlined_call_operand.hbm [shape: f32[1,2048], index: 2, kind: output, shape index: {}]
  %s3 = sld [smem:[#allocation0]]
  $region26: #{tpu_custom_call.1} parent=0
    _
  %s5 = ssub.s32 1, %s3
  %s6 = scalar_select 0, %s5, %s3
  $region1: #{tpu_custom_call.1} parent=0
    #allocation2 [shape = 'u8[8192]{0}', space=vmem, size = 0x2000, scoped, tag = 'input window, operand 0, single buffered']
    #allocation3 [shape = 's32[1]{0}', space=sflag, size = 0x4, scoped, tag = 'scoped memory for tpu_custom_call.1']
    #allocation4 [shape = 's32[1]{0}', space=sflag, size = 0x4, scoped, tag = 'scoped memory for tpu_custom_call.1']
    #allocation5 [shape = 'u8[8192]{0}', space=vmem, size = 0x2000, scoped, tag = 'input window, operand 1, single buffered']
    #allocation6 [shape = 's32[1]{0}', space=sflag, size = 0x4, scoped, tag = 'scoped memory for tpu_custom_call.1']
    #allocation7 [shape = 'u8[8192]{0}', space=vmem, size = 0x2000, scoped, tag = 'output window, operand 0, single buffered']
    %7 = vsyncpa [#allocation3], 0
    %8 = vsyncpa [#allocation6], 0
    %9 = vsyncpa [#allocation4], 0
    // Predicated region
    $region2: #{tpu_custom_call.1} parent=1 // pred_check
      _
    $region3: #{tpu_custom_call.1} parent=1 // pred_check_branch
      %11 = sbr.rel (0) target = $region5
    $region4: #{tpu_custom_call.1} parent=1 // pred_region
      %s13 = ssub.s32 256, 256
      %14 = vsyncadd [#allocation3], %s13
      %s16 = sshll.u32 [#allocation2], 4
      %s17 = int_to_ptr.vmem [resolvable:$true] %s16
      %19 = dma.hbm_to_vmem [thread:$0]  %s0, 256, %s17, [#allocation3]
    $region5: #{tpu_custom_call.1} parent=1 // pred_fallthru
      _
    // Predicated region
    $region6: #{tpu_custom_call.1} parent=1 // pred_check
      _
    $region7: #{tpu_custom_call.1} parent=1 // pred_check_branch
      %21 = sbr.rel (0) target = $region9
    $region8: #{tpu_custom_call.1} parent=1 // pred_region
      %s23 = ssub.s32 256, 256
      %24 = vsyncadd [#allocation6], %s23
      %s26 = sshll.u32 [#allocation5], 4
      %s27 = int_to_ptr.vmem [resolvable:$true] %s26
      %29 = dma.hbm_to_vmem [thread:$0]  %s1, 256, %s27, [#allocation6]
    $region9: #{tpu_custom_call.1} parent=1 // pred_fallthru
      _
    // Predicated region
    $region10: #{tpu_custom_call.1} parent=1 // pred_check
      _
    $region11: #{tpu_custom_call.1} parent=1 // pred_check_branch
      %31 = sbr.rel (0) target = $region13
    $region12: #{tpu_custom_call.1} parent=1 // pred_region
      %32 = dma.done [#allocation3], 256
    $region13: #{tpu_custom_call.1} parent=1 // pred_fallthru
      _
    // Predicated region
    $region14: #{tpu_custom_call.1} parent=1 // pred_check
      _
    $region15: #{tpu_custom_call.1} parent=1 // pred_check_branch
      %34 = sbr.rel (0) target = $region17
    $region16: #{tpu_custom_call.1} parent=1 // pred_region
      %35 = dma.done [#allocation6], 256
    $region17: #{tpu_custom_call.1} parent=1 // pred_fallthru
      _
    %v36 = vld [vmem:[#allocation2] sm:$0xff]
    %v37 = vld [vmem:[#allocation2 + $0x8] sm:$0xff]
    %v38 = vld [vmem:[#allocation5] sm:$0xff]
    %v39 = vld [vmem:[#allocation5 + $0x8] sm:$0xff]
    %v40 = vrcp.pop %v38
    %v41 = vmul.f32 %v36, %v40
    %v42 = vrcp.pop %v39
    %v43 = vmul.f32 %v37, %v42
    %44 = vst [vmem:[#allocation7] sm:$0xff] %v41
    %45 = vst [vmem:[#allocation7 + $0x8] sm:$0xff] %v43
    // Predicated region
    $region18: #{tpu_custom_call.1} parent=1 // pred_check
      _
    $region19: #{tpu_custom_call.1} parent=1 // pred_check_branch
      %47 = sbr.rel (0) target = $region21
    $region20: #{tpu_custom_call.1} parent=1 // pred_region
      %s49 = ssub.s32 256, 256
      %50 = vsyncadd [#allocation4], %s49
      %s52 = sshll.u32 [#allocation7], 4
      %s53 = int_to_ptr.vmem [resolvable:$true] %s52
      %55 = dma.vmem_to_hbm [thread:$0]  %s53, 256, %s2, [#allocation4]
    $region21: #{tpu_custom_call.1} parent=1 // pred_fallthru
      _
    // Predicated region
    $region22: #{tpu_custom_call.1} parent=1 // pred_check
      _
    $region23: #{tpu_custom_call.1} parent=1 // pred_check_branch
      %57 = sbr.rel (0) target = $region25
    $region24: #{tpu_custom_call.1} parent=1 // pred_region
      %58 = dma.done [#allocation4], 256
    $region25: #{tpu_custom_call.1} parent=1 // pred_fallthru
      _
    %59 = vsyncpa [#allocation3], 1
    %60 = vsyncpa [#allocation6], 1
    %61 = vsyncpa [#allocation4], 1

</llo_original>
